<compile_context>
chip_gen: v7x
topology: tpu7x:2x2x1
jax: 0.10.0
libtpu: 0.0.40
codegen_flags: <defaults>
</compile_context>

<pallas_src>
import functools

import jax
import jax.numpy as jnp
from jax.experimental import pallas as pl
from jax.experimental.pallas import tpu as pltpu

_LANE = 128      # lane width (last dim)
_SUBLANE = 8     # f32 sublane height (second-to-last dim)


def _round_up(n: int, m: int) -> int:
    return ((n + m - 1) // m) * m


def mlp_kernel(x_ref, w1_ref, b1_ref, w2_ref, b2_ref, o_ref):
    # relu(x @ w1 + b1) @ w2 + b2 on one batch tile; f32 MXU accumulation throughout.
    h = jnp.dot(x_ref[...], w1_ref[...], preferred_element_type=jnp.float32)
    h = jnp.maximum(h + b1_ref[...], 0.0)                       # bias + ReLU (VPU, f32)
    y = jnp.dot(h, w2_ref[...], preferred_element_type=jnp.float32)
    o_ref[...] = (y + b2_ref[...]).astype(o_ref.dtype)          # (tb, D_out) store


def prepare_params(w1, b1, w2, b2):
    """One-time weight preparation (outside the per-call forward path).

    Pads the hidden dim up to a 128-lane multiple so both matmuls see lane-dense
    tiles. Zero padding is exact: zero w1 cols + zero b1 -> relu(0)=0 hidden lanes,
    and the matching w2 rows are zero. The output dim is NOT padded.
    Weights are stored transposed vs. PyTorch so the kernel computes x @ W.
    """
    _, H = w1.shape
    D_out = w2.shape[1]
    H_pad = _round_up(H, _LANE)
    w1_p = jnp.pad(jnp.asarray(w1, jnp.float32), ((0, 0), (0, H_pad - H)))
    b1_p = jnp.pad(jnp.asarray(b1, jnp.float32), (0, H_pad - H)).reshape(1, H_pad)
    w2_p = jnp.pad(jnp.asarray(w2, jnp.float32), ((0, H_pad - H), (0, 0)))
    b2_p = jnp.asarray(b2, jnp.float32).reshape(1, D_out)
    return w1_p, b1_p, w2_p, b2_p


@functools.partial(jax.jit, static_argnames=("max_batch_tile",))
def net_approximator_forward(x, w1_p, b1_p, w2_p, b2_p, *, max_batch_tile=1024):
    """y = relu(x @ w1 + b1) @ w2 + b2  (same math as the PyTorch forward).

    x: (B, D_in) or (D_in,). w*_p / b*_p come from prepare_params().
    """
    # _prepare_data semantics: cast to f32, promote 1-D input to a batch of one.
    x = jnp.asarray(x, jnp.float32)
    if x.ndim == 1:
        x = x[None, :]
    B, D_in = x.shape
    H_pad = w1_p.shape[1]
    D_out = w2_p.shape[1]

    # Batch tile: large (amortizes ~0.35us/step overhead), capped so the grid has
    # >= 2 steps when B > 8 (lets "parallel" use both TensorCores on v7x).
    B8 = _round_up(B, _SUBLANE)
    tb = min(max_batch_tile, B8)
    if B8 >= 2 * _SUBLANE:
        tb = min(tb, _round_up(pl.cdiv(B8, 2), _SUBLANE))
    grid_b = pl.cdiv(B, tb)   # ragged last tile: OOB rows are garbage-in / masked-out,
                              # safe because the kernel has no cross-row reduction.

    return pl.pallas_call(
        mlp_kernel,
        out_shape=jax.ShapeDtypeStruct((B, D_out), jnp.float32),
        grid=(grid_b,),
        in_specs=[
            pl.BlockSpec((tb, D_in), lambda i: (i, 0)),        # x: tiled over batch
            pl.BlockSpec((D_in, H_pad), lambda i: (0, 0)),     # w1: resident in VMEM
            pl.BlockSpec((1, H_pad), lambda i: (0, 0)),        # b1: resident
            pl.BlockSpec((H_pad, D_out), lambda i: (0, 0)),    # w2: resident
            pl.BlockSpec((1, D_out), lambda i: (0, 0)),        # b2: resident
        ],
        out_specs=pl.BlockSpec((tb, D_out), lambda i: (i, 0)), # true-width writeback
        compiler_params=pltpu.CompilerParams(
            dimension_semantics=("parallel",),
        ),
    )(x, w1_p, b1_p, w2_p, b2_p)


if __name__ == "__main__":
    # Module shapes: NetApproximator(input_dim=4, output_dim=2, hidden_dim=32)
    D_in, H, D_out = 4, 32, 2

    key = jax.random.PRNGKey(0)
    kx, kx2, kw1, kb1, kw2, kb2 = jax.random.split(key, 6)

    # Deterministic PyTorch-style init: U(-1/sqrt(fan_in), 1/sqrt(fan_in))
    bound1 = 1.0 / jnp.sqrt(D_in)
    bound2 = 1.0 / jnp.sqrt(H)
    w1 = jax.random.uniform(kw1, (D_in, H), jnp.float32, -bound1, bound1)
    b1 = jax.random.uniform(kb1, (H,), jnp.float32, -bound1, bound1)
    w2 = jax.random.uniform(kw2, (H, D_out), jnp.float32, -bound2, bound2)
    b2 = jax.random.uniform(kb2, (D_out,), jnp.float32, -bound2, bound2)

    # Pad/cast weights once (hoisted out of the per-forward path).
    w1_p, b1_p, w2_p, b2_p = prepare_params(w1, b1, w2, b2)

    def ref(x):
        x = jnp.atleast_2d(jnp.asarray(x, jnp.float32))
        return jnp.maximum(x @ w1 + b1, 0.0) @ w2 + b2

    # Small batch (B=2): single grid step, overhanging batch tile.
    x = jax.random.normal(kx, (2, D_in), jnp.float32)
    y = net_approximator_forward(x, w1_p, b1_p, w2_p, b2_p)
    jax.block_until_ready(y)
    assert y.shape == (2, D_out)
    assert jnp.allclose(y, ref(x), atol=1e-5), "mismatch vs reference (B=2)"

    # Non-multiple batch (B=20): 2 grid steps with a ragged last tile.
    x2 = jax.random.normal(kx2, (20, D_in), jnp.float32)
    y2 = net_approximator_forward(x2, w1_p, b1_p, w2_p, b2_p)
    jax.block_until_ready(y2)
    assert y2.shape == (20, D_out)
    assert jnp.allclose(y2, ref(x2), atol=1e-5), "mismatch vs reference (B=20)"

    # 1-D input promoted to a batch of one (mirrors _prepare_data).
    y3 = net_approximator_forward(x[0], w1_p, b1_p, w2_p, b2_p)
    jax.block_until_ready(y3)
    assert y3.shape == (1, D_out)
    assert jnp.allclose(y3, ref(x[0]), atol=1e-5), "mismatch vs reference (1-D input)"

    print("KERNEL_OK")
</pallas_src>

<mosaic_0001>
module attributes {stable_mosaic.version = 11 : i64} {
  func.func @mlp_kernel(%arg0: i32, %arg1: memref<8x4xf32, #tpu.memory_space<vmem>>, %arg2: memref<4x128xf32, #tpu.memory_space<vmem>>, %arg3: memref<1x128xf32, #tpu.memory_space<vmem>>, %arg4: memref<128x2xf32, #tpu.memory_space<vmem>>, %arg5: memref<1x2xf32, #tpu.memory_space<vmem>>, %arg6: memref<8x2xf32, #tpu.memory_space<vmem>>) attributes {dimension_semantics = [#tpu.dimension_semantics<parallel>], iteration_bounds = array<i64: 1>, scalar_prefetch = 0 : i64, scratch_operands = 0 : i64, tpu.core_type = #tpu.core_type<tc>, window_params = [{transform_indices = @transform_0, window_bounds = array<i64: 8, 4>}, {pipeline_mode = #tpu.pipeline_mode<synchronous>, transform_indices = @transform_1, window_bounds = array<i64: 4, 128>}, {pipeline_mode = #tpu.pipeline_mode<synchronous>, transform_indices = @transform_2, window_bounds = array<i64: 1, 128>}, {pipeline_mode = #tpu.pipeline_mode<synchronous>, transform_indices = @transform_3, window_bounds = array<i64: 128, 2>}, {pipeline_mode = #tpu.pipeline_mode<synchronous>, transform_indices = @transform_4, window_bounds = array<i64: 1, 2>}, {transform_indices = @transform_5, window_bounds = array<i64: 8, 2>}]} {
    %c0 = arith.constant 0 : index
    %c0_0 = arith.constant 0 : index
    %0 = vector.load %arg1[%c0, %c0_0] : memref<8x4xf32, #tpu.memory_space<vmem>>, vector<8x4xf32>
    %c0_1 = arith.constant 0 : index
    %c0_2 = arith.constant 0 : index
    %1 = vector.load %arg2[%c0_1, %c0_2] : memref<4x128xf32, #tpu.memory_space<vmem>>, vector<4x128xf32>
    %cst = arith.constant dense<0.000000e+00> : vector<8x128xf32>
    %2 = tpu.matmul %0, %1, %cst {dimension_numbers = #tpu.dot_dimension_numbers<[1], [0], [0], [1], [0, 0, 1, 1], [], []>} : vector<8x4xf32>, vector<4x128xf32>, vector<8x128xf32> -> vector<8x128xf32>
    %c0_3 = arith.constant 0 : index
    %c0_4 = arith.constant 0 : index
    %3 = vector.load %arg3[%c0_3, %c0_4] : memref<1x128xf32, #tpu.memory_space<vmem>>, vector<1x128xf32>
    %4 = vector.broadcast %3 : vector<1x128xf32> to vector<8x128xf32>
    %5 = arith.addf %2, %4 : vector<8x128xf32>
    %cst_5 = arith.constant 0.000000e+00 : f32
    %6 = vector.broadcast %cst_5 : f32 to vector<8x128xf32>
    %7 = arith.maximumf %5, %6 : vector<8x128xf32>
    %c0_6 = arith.constant 0 : index
    %c0_7 = arith.constant 0 : index
    %8 = vector.load %arg4[%c0_6, %c0_7] : memref<128x2xf32, #tpu.memory_space<vmem>>, vector<128x2xf32>
    %cst_8 = arith.constant dense<0.000000e+00> : vector<8x2xf32>
    %9 = tpu.matmul %7, %8, %cst_8 {dimension_numbers = #tpu.dot_dimension_numbers<[1], [0], [0], [1], [0, 0, 1, 1], [], []>} : vector<8x128xf32>, vector<128x2xf32>, vector<8x2xf32> -> vector<8x2xf32>
    %c0_9 = arith.constant 0 : index
    %c0_10 = arith.constant 0 : index
    %10 = vector.load %arg5[%c0_9, %c0_10] : memref<1x2xf32, #tpu.memory_space<vmem>>, vector<1x2xf32>
    %11 = vector.broadcast %10 : vector<1x2xf32> to vector<8x2xf32>
    %12 = arith.addf %9, %11 : vector<8x2xf32>
    %c0_11 = arith.constant 0 : index
    %c0_12 = arith.constant 0 : index
    %13 = vector.load %arg6[%c0_11, %c0_12] : memref<8x2xf32, #tpu.memory_space<vmem>>, vector<8x2xf32>
    tpu.vector_store %arg6[%c0_11, %c0_12], %12 {strides = array<i32>} : memref<8x2xf32, #tpu.memory_space<vmem>>, vector<8x2xf32>,
    return
  }
  func.func @transform_0(%arg0: i32) -> (i32, i32) {
    %c0_i32 = arith.constant 0 : i32
    %c0_i32_0 = arith.constant 0 : i32
    return %arg0, %c0_i32 : i32, i32
  }
  func.func @transform_1(%arg0: i32) -> (i32, i32) {
    %c0_i32 = arith.constant 0 : i32
    %c0_i32_0 = arith.constant 0 : i32
    %c0_i32_1 = arith.constant 0 : i32
    return %c0_i32, %c0_i32_0 : i32, i32
  }
  func.func @transform_2(%arg0: i32) -> (i32, i32) {
    %c0_i32 = arith.constant 0 : i32
    %c0_i32_0 = arith.constant 0 : i32
    %c0_i32_1 = arith.constant 0 : i32
    return %c0_i32, %c0_i32_0 : i32, i32
  }
  func.func @transform_3(%arg0: i32) -> (i32, i32) {
    %c0_i32 = arith.constant 0 : i32
    %c0_i32_0 = arith.constant 0 : i32
    %c0_i32_1 = arith.constant 0 : i32
    return %c0_i32, %c0_i32_0 : i32, i32
  }
  func.func @transform_4(%arg0: i32) -> (i32, i32) {
    %c0_i32 = arith.constant 0 : i32
    %c0_i32_0 = arith.constant 0 : i32
    %c0_i32_1 = arith.constant 0 : i32
    return %c0_i32, %c0_i32_0 : i32, i32
  }
  func.func @transform_5(%arg0: i32) -> (i32, i32) {
    %c0_i32 = arith.constant 0 : i32
    %c0_i32_0 = arith.constant 0 : i32
    return %arg0, %c0_i32 : i32, i32
  }
}

</mosaic_0001>

<llo_original>
// kernel: net_approximator_forward.1
$region0: #{net_approximator_forward.1}
  #allocation0 [shape = 'u32[]', space=smem, size = 0x4, offset = 0x4, fixed_abs, tag = 'smem constant byte address 0x4 - core index']
  #allocation1 [shape = 'u32[144,128]{1,0:T(1,128)}', space=vmem, size = 0x12000, scoped, tag = 'internal scratch']
  %s0 = inlined_call_operand.vmem [shape: f32[2,4], index: 0, kind: input, shape index: {}]
  %s1 = inlined_call_operand.vmem [shape: f32[4,128], index: 1, kind: input, shape index: {}]
  %s2 = inlined_call_operand.vmem [shape: f32[1,128], index: 2, kind: input, shape index: {}]
  %s3 = inlined_call_operand.vmem [shape: f32[128,2], index: 3, kind: input, shape index: {}]
  %s4 = inlined_call_operand.vmem [shape: f32[1,2], index: 4, kind: input, shape index: {}]
  %s5 = inlined_call_operand.hbm [shape: f32[2,2], index: 5, kind: output, shape index: {}]
  %s6 = sld [smem:[#allocation0]]
  $region30: #{net_approximator_forward.1} parent=0
    _
  %s8 = ssub.s32 1, %s6
  %s9 = scalar_select 0, %s8, %s6
  $region1: #{net_approximator_forward.1} parent=0
    #allocation2 [shape = 'u8[4096]{0}', space=vmem, size = 0x1000, scoped, tag = 'output window, operand 0, single buffered']
    #allocation3 [shape = 's32[1]{0}', space=sflag, size = 0x4, scoped, tag = 'scoped memory for net_approximator_forward.1']
    %10 = vsyncpa [#allocation3], 0
    // Predicated region
    $region2: #{net_approximator_forward.1} parent=1 // pred_check
      _
    $region3: #{net_approximator_forward.1} parent=1 // pred_check_branch
      %12 = sbr.rel (0) target = $region5
    $region4: #{net_approximator_forward.1} parent=1 // pred_region
      _
    $region5: #{net_approximator_forward.1} parent=1 // pred_fallthru
      _
    // Predicated region
    $region6: #{net_approximator_forward.1} parent=1 // pred_check
      _
    $region7: #{net_approximator_forward.1} parent=1 // pred_check_branch
      %14 = sbr.rel (0) target = $region9
    $region8: #{net_approximator_forward.1} parent=1 // pred_region
      _
    $region9: #{net_approximator_forward.1} parent=1 // pred_fallthru
      _
    // Predicated region
    $region10: #{net_approximator_forward.1} parent=1 // pred_check
      _
    $region11: #{net_approximator_forward.1} parent=1 // pred_check_branch
      %16 = sbr.rel (0) target = $region13
    $region12: #{net_approximator_forward.1} parent=1 // pred_region
      _
    $region13: #{net_approximator_forward.1} parent=1 // pred_fallthru
      _
    // Predicated region
    $region14: #{net_approximator_forward.1} parent=1 // pred_check
      _
    $region15: #{net_approximator_forward.1} parent=1 // pred_check_branch
      %18 = sbr.rel (0) target = $region17
    $region16: #{net_approximator_forward.1} parent=1 // pred_region
      _
    $region17: #{net_approximator_forward.1} parent=1 // pred_fallthru
      _
    // Predicated region
    $region18: #{net_approximator_forward.1} parent=1 // pred_check
      _
    $region19: #{net_approximator_forward.1} parent=1 // pred_check_branch
      %20 = sbr.rel (0) target = $region21
    $region20: #{net_approximator_forward.1} parent=1 // pred_region
      _
    $region21: #{net_approximator_forward.1} parent=1 // pred_fallthru
      _
    %v21 = vld [vmem:[%s0] sm:$0xff]
    %v22 = vld [vmem:[%s1] sm:$0xf]
    %v23 = vld [vmem:[%s2] sm:$0x1]
    %v25 = vlaneseq
    %v26 = vshrl.u32 %v25, 7
    %v27 = vsub.s32 0, %v26
    %v28 = vrot.slane %v23, %v27
    %vm30 = vcmask 31744
    %v32 = vsel %vm30, %v21, 0
    %vm34 = vcmask 1043456
    %v36 = vsel %vm34, %v22, 0
    %38 = vmatprep.subr.mxu0 0.0
    %39 = vmatpush1.msra.mxu0 %v36
    %40 = vmatprep.subr.mxu0 0.0
    %41 = vmatpush1.msra.mxu0 0.0
    %42 = vmatprep.subr.mxu0 0.0
    %43 = vmatpush1.msra.mxu0 0.0
    %44 = vmatprep.subr.mxu0 0.0
    %45 = vmatpush1.msra.mxu0 0.0
    %46 = vmatprep.subr.mxu0 0.0
    %47 = vmatpush1.msra.mxu0 0.0
    %48 = vmatprep.subr.mxu0 0.0
    %49 = vmatpush1.msra.mxu0 0.0
    %50 = vmatprep.subr.mxu0 0.0
    %51 = vmatpush1.msra.mxu0 0.0
    %52 = vmatprep.subr.mxu0 0.0
    %53 = vmatpush1.msra.mxu0 0.0
    %54 = vmatprep.subr.mxu0 0.0
    %55 = vmatpush1.msra.mxu0 0.0
    %56 = vmatprep.subr.mxu0 0.0
    %57 = vmatpush1.msra.mxu0 0.0
    %58 = vmatprep.subr.mxu0 0.0
    %59 = vmatpush1.msra.mxu0 0.0
    %60 = vmatprep.subr.mxu0 0.0
    %61 = vmatpush1.msra.mxu0 0.0
    %62 = vmatprep.subr.mxu0 0.0
    %63 = vmatpush1.msra.mxu0 0.0
    %64 = vmatprep.subr.mxu0 0.0
    %65 = vmatpush1.msra.mxu0 0.0
    %66 = vmatprep.subr.mxu0 0.0
    %67 = vmatpush1.msra.mxu0 0.0
    %68 = vmatprep.subr.mxu0 0.0
    %69 = vmatpush1.msra.mxu0 0.0
    %70 = vmatprep.subr.mxu0 0.0
    %71 = vmatpush1.msra.mxu0 0.0
    %72 = vmatprep.subr.mxu0 0.0
    %73 = vmatpush1.msra.mxu0 0.0
    %74 = vmatprep.subr.mxu0 0.0
    %75 = vmatpush1.msra.mxu0 0.0
    %76 = vmatprep.subr.mxu0 0.0
    %77 = vmatpush1.msra.mxu0 0.0
    %78 = vmatprep.subr.mxu0 0.0
    %79 = vmatpush1.msra.mxu0 0.0
    %80 = vmatprep.subr.mxu0 0.0
    %81 = vmatpush1.msra.mxu0 0.0
    %82 = vmatprep.subr.mxu0 0.0
    %83 = vmatpush1.msra.mxu0 0.0
    %84 = vmatprep.subr.mxu0 0.0
    %85 = vmatpush1.msra.mxu0 0.0
    %86 = vmatprep.subr.mxu0 0.0
    %87 = vmatpush1.msra.mxu0 0.0
    %88 = vmatprep.subr.mxu0 0.0
    %89 = vmatpush1.msra.mxu0 0.0
    %90 = vmatprep.subr.mxu0 0.0
    %91 = vmatpush1.msra.mxu0 0.0
    %92 = vmatprep.subr.mxu0 0.0
    %93 = vmatpush1.msra.mxu0 0.0
    %94 = vmatprep.subr.mxu0 0.0
    %95 = vmatpush1.msra.mxu0 0.0
    %96 = vmatprep.subr.mxu0 0.0
    %97 = vmatpush1.msra.mxu0 0.0
    %98 = vmatprep.subr.mxu0 0.0
    %99 = vmatpush1.msra.mxu0 0.0
    %100 = vmatprep.subr.mxu0 0.0
    %101 = vmatpush1.msra.mxu0 0.0
    %102 = vmatprep.mubr.f32.mxu0 0.0
    %103 = vmatmul.mubr.f32.gmra.mrb[0].mxu0 %v32
    %v104 = vpop.f32.mrb[0].mxu0
    %v105 = vadd.f32 %v28, %v104
    %v106 = vpop.f32.mrb[0].mxu0
    %107 = vdwg.mxu0
    %v108 = vmax.f32 %v105, 0.0
    %v109 = vld [vmem:[%s3] sm:$0xff]
    %v110 = vld [vmem:[%s3 + $0x8] sm:$0xff]
    %v111 = vld [vmem:[%s3 + $0x10] sm:$0xff]
    %v112 = vld [vmem:[%s3 + $0x18] sm:$0xff]
    %v113 = vld [vmem:[%s3 + $0x20] sm:$0xff]
    %v114 = vld [vmem:[%s3 + $0x28] sm:$0xff]
    %v115 = vld [vmem:[%s3 + $0x30] sm:$0xff]
    %v116 = vld [vmem:[%s3 + $0x38] sm:$0xff]
    %v117 = vld [vmem:[%s3 + $0x40] sm:$0xff]
    %v118 = vld [vmem:[%s3 + $0x48] sm:$0xff]
    %v119 = vld [vmem:[%s3 + $0x50] sm:$0xff]
    %v120 = vld [vmem:[%s3 + $0x58] sm:$0xff]
    %v121 = vld [vmem:[%s3 + $0x60] sm:$0xff]
    %v122 = vld [vmem:[%s3 + $0x68] sm:$0xff]
    %v123 = vld [vmem:[%s3 + $0x70] sm:$0xff]
    %v124 = vld [vmem:[%s3 + $0x78] sm:$0xff]
    %v125 = vld [vmem:[%s4] sm:$0x1]
    %v127 = vlaneseq
    %v128 = vshrl.u32 %v127, 7
    %v129 = vsub.s32 0, %v128
    %v130 = vrot.slane %v125, %v129
    %132 = vmatprep.subr.mxu0 0.0
    %133 = vmatpush1.msra.mxu0 %v109
    %134 = vmatprep.subr.mxu0 0.0
    %135 = vmatpush1.msra.mxu0 %v110
    %136 = vmatprep.subr.mxu0 0.0
    %137 = vmatpush1.msra.mxu0 %v111
    %138 = vmatprep.subr.mxu0 0.0
    %139 = vmatpush1.msra.mxu0 %v112
    %140 = vmatprep.subr.mxu0 0.0
    %141 = vmatpush1.msra.mxu0 %v113
    %142 = vmatprep.subr.mxu0 0.0
    %143 = vmatpush1.msra.mxu0 %v114
    %144 = vmatprep.subr.mxu0 0.0
    %145 = vmatpush1.msra.mxu0 %v115
    %146 = vmatprep.subr.mxu0 0.0
    %147 = vmatpush1.msra.mxu0 %v116
    %148 = vmatprep.subr.mxu0 0.0
    %149 = vmatpush1.msra.mxu0 %v117
    %150 = vmatprep.subr.mxu0 0.0
    %151 = vmatpush1.msra.mxu0 %v118
    %152 = vmatprep.subr.mxu0 0.0
    %153 = vmatpush1.msra.mxu0 %v119
    %154 = vmatprep.subr.mxu0 0.0
    %155 = vmatpush1.msra.mxu0 %v120
    %156 = vmatprep.subr.mxu0 0.0
    %157 = vmatpush1.msra.mxu0 %v121
    %158 = vmatprep.subr.mxu0 0.0
    %159 = vmatpush1.msra.mxu0 %v122
    %160 = vmatprep.subr.mxu0 0.0
    %161 = vmatpush1.msra.mxu0 %v123
    %162 = vmatprep.subr.mxu0 0.0
    %163 = vmatpush1.msra.mxu0 %v124
    %164 = vmatprep.subr.mxu0 0.0
    %165 = vmatpush1.msra.mxu0 0.0
    %166 = vmatprep.subr.mxu0 0.0
    %167 = vmatpush1.msra.mxu0 0.0
    %168 = vmatprep.subr.mxu0 0.0
    %169 = vmatpush1.msra.mxu0 0.0
    %170 = vmatprep.subr.mxu0 0.0
    %171 = vmatpush1.msra.mxu0 0.0
    %172 = vmatprep.subr.mxu0 0.0
    %173 = vmatpush1.msra.mxu0 0.0
    %174 = vmatprep.subr.mxu0 0.0
    %175 = vmatpush1.msra.mxu0 0.0
    %176 = vmatprep.subr.mxu0 0.0
    %177 = vmatpush1.msra.mxu0 0.0
    %178 = vmatprep.subr.mxu0 0.0
    %179 = vmatpush1.msra.mxu0 0.0
    %180 = vmatprep.subr.mxu0 0.0
    %181 = vmatpush1.msra.mxu0 0.0
    %182 = vmatprep.subr.mxu0 0.0
    %183 = vmatpush1.msra.mxu0 0.0
    %184 = vmatprep.subr.mxu0 0.0
    %185 = vmatpush1.msra.mxu0 0.0
    %186 = vmatprep.subr.mxu0 0.0
    %187 = vmatpush1.msra.mxu0 0.0
    %188 = vmatprep.subr.mxu0 0.0
    %189 = vmatpush1.msra.mxu0 0.0
    %190 = vmatprep.subr.mxu0 0.0
    %191 = vmatpush1.msra.mxu0 0.0
    %192 = vmatprep.subr.mxu0 0.0
    %193 = vmatpush1.msra.mxu0 0.0
    %194 = vmatprep.subr.mxu0 0.0
    %195 = vmatpush1.msra.mxu0 0.0
    %196 = vmatprep.mubr.f32.mxu0 0.0
    %197 = vmatmul.mubr.f32.gmra.mrb[0].mxu0 %v108
    %v198 = vpop.f32.mrb[0].mxu0
    %v199 = vadd.f32 %v130, %v198
    %v200 = vpop.f32.mrb[0].mxu0
    %201 = vdwg.mxu0
    %vm202 = vcmask 15360
    %203 = vst.msk [vmem:[#allocation2] sm:$0xff] %vm202, %v199
    // Predicated region
    $region22: #{net_approximator_forward.1} parent=1 // pred_check
      _
    $region23: #{net_approximator_forward.1} parent=1 // pred_check_branch
      %205 = sbr.rel (0) target = $region25
    $region24: #{net_approximator_forward.1} parent=1 // pred_region
      %s207 = ssub.s32 128, 32
      %208 = vsyncadd [#allocation3], %s207
      %s209 = sshll.u32 [#allocation2], 4
      %s210 = int_to_ptr.vmem [resolvable:$true] %s209
      %215 = dma.vmem_to_hbm [thread:$0]  %s210, 32, %s5, [#allocation3], 32, 32, 2
    $region25: #{net_approximator_forward.1} parent=1 // pred_fallthru
      _
    // Predicated region
    $region26: #{net_approximator_forward.1} parent=1 // pred_check
      _
    $region27: #{net_approximator_forward.1} parent=1 // pred_check_branch
      %217 = sbr.rel (0) target = $region29
    $region28: #{net_approximator_forward.1} parent=1 // pred_region
      %218 = dma.done [#allocation3], 128
    $region29: #{net_approximator_forward.1} parent=1 // pred_fallthru
      _
    %219 = vsyncpa [#allocation3], 1

</llo_original>
